<compile_context>
chip_gen: v7x
topology: tpu7x:2x2x1
jax: 0.10.0
libtpu: 0.0.40
codegen_flags: <defaults>
</compile_context>

<pallas_src>
import jax
import jax.numpy as jnp
from jax.experimental import pallas as pl
from jax.experimental.pallas import tpu as pltpu

LANE = 128
TILE_BUDGET_BYTES = 8 * 1024 * 1024  # per-block patch budget (bf16), VMEM-safe


def _round_up(x, m):
    return ((x + m - 1) // m) * m


def fused_backbone_kernel(patches_ref, wconv_ref, bconv_ref, wfc_ref, bfc_ref,
                          out_ref):
    """Process one tile of whole images (both siamese branches share weights).

    patches_ref: (tile_m, Kpad)   bf16  im2col patches (lane-dense, zero-padded K)
    wconv_ref:   (Kpad, CoutP)    bf16  conv weights as a single matmul operand
    bconv_ref:   (1, CoutP)       f32   conv bias
    wfc_ref:     (CoutP, DP)      bf16  final projection with 1/HW pre-folded
    bfc_ref:     (1, DP)          f32   projection bias
    out_ref:     (imgs_per_tile, DP) f32  embeddings for this tile's images
    """
    n_imgs = out_ref.shape[0]
    hw = patches_ref.shape[0] // n_imgs
    coutp = wconv_ref.shape[1]

    # 3x3 conv == one im2col matmul on the MXU, f32 accumulation.
    act = jnp.dot(patches_ref[...], wconv_ref[...],
                  preferred_element_type=jnp.float32)          # (tile_m, CoutP)
    act = jnp.maximum(act + bconv_ref[...], 0.0)               # bias + ReLU (VPU)

    # Global pool: pure sum over spatial positions (1/HW folded into wfc).
    # hw is a multiple of 8, so the sublane split is layout-aligned.
    pooled = jnp.sum(act.reshape(n_imgs, hw, coutp), axis=1)   # (n_imgs, CoutP)

    # Final projection to the embedding (bf16 operands, f32 accumulation).
    emb = jnp.dot(pooled.astype(jnp.bfloat16), wfc_ref[...],
                  preferred_element_type=jnp.float32)          # (n_imgs, DP)
    out_ref[...] = emb + bfc_ref[...]


def siamese_backbone_pallas(patches, wconv2, bconv_p, wfc_p, bfc_p,
                            total_imgs, hw):
    """One pallas_call covering BOTH siamese branches (pair folded into M)."""
    m_total, kpad = patches.shape
    coutp = wconv2.shape[1]
    dp = wfc_p.shape[1]

    # Whole-image M tiles: largest image count whose bf16 patch block fits the
    # budget.  At demo shapes this is all images -> a single grid step.
    per_img_bytes = hw * kpad * 2
    imgs_per_tile = max(1, min(total_imgs, TILE_BUDGET_BYTES // per_img_bytes))
    while total_imgs % imgs_per_tile != 0:
        imgs_per_tile -= 1
    num_tiles = total_imgs // imgs_per_tile
    tile_m = imgs_per_tile * hw

    cost = pl.CostEstimate(
        flops=int(2 * m_total * kpad * coutp + 2 * total_imgs * coutp * dp),
        transcendentals=0,
        bytes_accessed=int(m_total * kpad * 2                 # bf16 patches
                           + (kpad * coutp + coutp * dp) * 2  # bf16 weights
                           + (coutp + dp) * 4                 # f32 biases
                           + total_imgs * dp * 4),            # f32 output
    )

    return pl.pallas_call(
        fused_backbone_kernel,
        out_shape=jax.ShapeDtypeStruct((total_imgs, dp), jnp.float32),
        grid=(num_tiles,),
        in_specs=[
            pl.BlockSpec((tile_m, kpad), lambda i: (i, 0)),   # patch tile
            pl.BlockSpec((kpad, coutp), lambda i: (0, 0)),    # shared weights
            pl.BlockSpec((1, coutp), lambda i: (0, 0)),
            pl.BlockSpec((coutp, dp), lambda i: (0, 0)),
            pl.BlockSpec((1, dp), lambda i: (0, 0)),
        ],
        out_specs=pl.BlockSpec((imgs_per_tile, dp), lambda i: (i, 0)),
        compiler_params=pltpu.CompilerParams(
            dimension_semantics=("parallel",),
            vmem_limit_bytes=32 * 1024 * 1024,
        ),
        cost_estimate=cost,
    )(patches, wconv2, bconv_p, wfc_p, bfc_p)


def kinship_forward(x1_nchw, x2_nchw, params):
    """Siamese forward: shared backbone applied to both inputs -> (emb1, emb2)."""
    wconv, bconv, wfc, bfc = params
    n, cin, h, w = x1_nchw.shape
    cout = wconv.shape[-1]
    d = wfc.shape[1]
    hw = h * w
    k = 9 * cin
    kpad = _round_up(k, LANE)
    coutp = _round_up(cout, LANE)
    dp = _round_up(d, LANE)

    # Fused im2col producer: bf16 BEFORE im2col, lane padding built in the same
    # concatenate -> exactly one bf16 HBM copy of the patch slab.
    def im2col_bf16(x_nchw):
        x = jnp.transpose(x_nchw, (0, 2, 3, 1)).astype(jnp.bfloat16)  # NHWC bf16
        xp = jnp.pad(x, ((0, 0), (1, 1), (1, 1), (0, 0)))             # SAME pad
        taps = [xp[:, dh:dh + h, dw:dw + w, :]
                for dh in range(3) for dw in range(3)]
        taps.append(jnp.zeros((n, h, w, kpad - k), jnp.bfloat16))     # K lane pad
        return jnp.concatenate(taps, axis=-1).reshape(n * hw, kpad)

    # Pair folded into the M dimension: (2*N*H*W, Kpad).
    patches = jnp.concatenate([im2col_bf16(x1_nchw), im2col_bf16(x2_nchw)],
                              axis=0)

    # Zero-pad frozen weights to MXU/lane-friendly sizes (zeros are benign).
    wconv2 = jnp.pad(wconv.reshape(k, cout),
                     ((0, kpad - k), (0, coutp - cout))).astype(jnp.bfloat16)
    bconv_p = jnp.pad(bconv.reshape(1, cout), ((0, 0), (0, coutp - cout)))
    # Fold 1/HW of the global-average-pool into the frozen FC weights.
    wfc_p = jnp.pad(wfc / float(hw),
                    ((0, coutp - cout), (0, dp - d))).astype(jnp.bfloat16)
    bfc_p = jnp.pad(bfc.reshape(1, d), ((0, 0), (0, dp - d)))

    out = siamese_backbone_pallas(patches, wconv2, bconv_p, wfc_p, bfc_p,
                                  2 * n, hw)                    # (2*N, DP)
    emb = out.reshape(2, n, dp)[:, :, :d]                       # drop lane pad
    return emb[0], emb[1]


def backbone_reference(x_nchw, params):
    """Pure-JAX f32 reference for correctness checking."""
    wconv, bconv, wfc, bfc = params
    x = jnp.transpose(x_nchw, (0, 2, 3, 1))  # NHWC
    y = jax.lax.conv_general_dilated(
        x, wconv, window_strides=(1, 1), padding="SAME",
        dimension_numbers=("NHWC", "HWIO", "NHWC"),
    ) + bconv.reshape(1, 1, 1, -1)
    y = jnp.maximum(y, 0.0)
    pooled = jnp.mean(y, axis=(1, 2))
    return pooled @ wfc + bfc


if __name__ == "__main__":
    # Small shapes consistent with the siamese image-pair forward pass.
    N, Cin, H, W = 2, 4, 16, 16
    Cout, D = 8, 32

    key = jax.random.PRNGKey(0)
    k_x1, k_x2, k_wc, k_bc, k_wf, k_bf = jax.random.split(key, 6)

    x1 = jax.random.normal(k_x1, (N, Cin, H, W), dtype=jnp.float32)
    x2 = jax.random.normal(k_x2, (N, Cin, H, W), dtype=jnp.float32)

    # Deterministic synthetic backbone parameters (frozen).
    wconv = jax.random.normal(k_wc, (3, 3, Cin, Cout), dtype=jnp.float32) * 0.1
    bconv = jax.random.normal(k_bc, (1, Cout), dtype=jnp.float32) * 0.05
    wfc = jax.random.normal(k_wf, (Cout, D), dtype=jnp.float32) * 0.1
    bfc = jax.random.normal(k_bf, (1, D), dtype=jnp.float32) * 0.05
    params = (wconv, bconv, wfc, bfc)

    emb1, emb2 = jax.jit(kinship_forward)(x1, x2, params)
    jax.block_until_ready((emb1, emb2))

    # Verify against the pure-JAX f32 reference (bf16 MXU feeds -> looser tol).
    ref1 = backbone_reference(x1, params)
    ref2 = backbone_reference(x2, params)
    assert emb1.shape == (N, D) and emb2.shape == (N, D)
    assert jnp.allclose(emb1, ref1, rtol=2e-2, atol=1e-2)
    assert jnp.allclose(emb2, ref2, rtol=2e-2, atol=1e-2)

    print("KERNEL_OK")
</pallas_src>

<mosaic_0001>
module attributes {stable_mosaic.version = 11 : i64} {
  func.func @fused_backbone_kernel(%arg0: i32, %arg1: memref<1024x128xbf16, #tpu.memory_space<vmem>>, %arg2: memref<128x128xbf16, #tpu.memory_space<vmem>>, %arg3: memref<1x128xf32, #tpu.memory_space<vmem>>, %arg4: memref<128x128xbf16, #tpu.memory_space<vmem>>, %arg5: memref<1x128xf32, #tpu.memory_space<vmem>>, %arg6: memref<4x128xf32, #tpu.memory_space<vmem>>) attributes {dimension_semantics = [#tpu.dimension_semantics<parallel>], iteration_bounds = array<i64: 1>, scalar_prefetch = 0 : i64, scratch_operands = 0 : i64, tpu.core_type = #tpu.core_type<tc>, window_params = [{transform_indices = @transform_0, window_bounds = array<i64: 1024, 128>}, {pipeline_mode = #tpu.pipeline_mode<synchronous>, transform_indices = @transform_1, window_bounds = array<i64: 128, 128>}, {pipeline_mode = #tpu.pipeline_mode<synchronous>, transform_indices = @transform_2, window_bounds = array<i64: 1, 128>}, {pipeline_mode = #tpu.pipeline_mode<synchronous>, transform_indices = @transform_3, window_bounds = array<i64: 128, 128>}, {pipeline_mode = #tpu.pipeline_mode<synchronous>, transform_indices = @transform_4, window_bounds = array<i64: 1, 128>}, {transform_indices = @transform_5, window_bounds = array<i64: 4, 128>}]} {
    %c0 = arith.constant 0 : index
    %c0_0 = arith.constant 0 : index
    %0 = vector.load %arg1[%c0, %c0_0] : memref<1024x128xbf16, #tpu.memory_space<vmem>>, vector<1024x128xbf16>
    %c0_1 = arith.constant 0 : index
    %c0_2 = arith.constant 0 : index
    %1 = vector.load %arg2[%c0_1, %c0_2] : memref<128x128xbf16, #tpu.memory_space<vmem>>, vector<128x128xbf16>
    %cst = arith.constant dense<0.000000e+00> : vector<1024x128xf32>
    %2 = tpu.matmul %0, %1, %cst {dimension_numbers = #tpu.dot_dimension_numbers<[1], [0], [0], [1], [0, 0, 1, 1], [], []>} : vector<1024x128xbf16>, vector<128x128xbf16>, vector<1024x128xf32> -> vector<1024x128xf32>
    %c0_3 = arith.constant 0 : index
    %c0_4 = arith.constant 0 : index
    %3 = vector.load %arg3[%c0_3, %c0_4] : memref<1x128xf32, #tpu.memory_space<vmem>>, vector<1x128xf32>
    %4 = vector.broadcast %3 : vector<1x128xf32> to vector<1024x128xf32>
    %5 = arith.addf %2, %4 : vector<1024x128xf32>
    %cst_5 = arith.constant 0.000000e+00 : f32
    %6 = vector.broadcast %cst_5 : f32 to vector<1024x128xf32>
    %7 = arith.maximumf %5, %6 : vector<1024x128xf32>
    %8 = vector.shape_cast %7 : vector<1024x128xf32> to vector<4x256x128xf32>
    %cst_6 = arith.constant dense<0.000000e+00> : vector<4x128xf32>
    %9 = vector.multi_reduction <add>, %8, %cst_6 [1] : vector<4x256x128xf32> to vector<4x128xf32>
    %10 = arith.truncf %9 : vector<4x128xf32> to vector<4x128xbf16>
    %c0_7 = arith.constant 0 : index
    %c0_8 = arith.constant 0 : index
    %11 = vector.load %arg4[%c0_7, %c0_8] : memref<128x128xbf16, #tpu.memory_space<vmem>>, vector<128x128xbf16>
    %cst_9 = arith.constant dense<0.000000e+00> : vector<4x128xf32>
    %12 = tpu.matmul %10, %11, %cst_9 {dimension_numbers = #tpu.dot_dimension_numbers<[1], [0], [0], [1], [0, 0, 1, 1], [], []>} : vector<4x128xbf16>, vector<128x128xbf16>, vector<4x128xf32> -> vector<4x128xf32>
    %c0_10 = arith.constant 0 : index
    %c0_11 = arith.constant 0 : index
    %13 = vector.load %arg5[%c0_10, %c0_11] : memref<1x128xf32, #tpu.memory_space<vmem>>, vector<1x128xf32>
    %14 = vector.broadcast %13 : vector<1x128xf32> to vector<4x128xf32>
    %15 = arith.addf %12, %14 : vector<4x128xf32>
    %c0_12 = arith.constant 0 : index
    %c0_13 = arith.constant 0 : index
    %16 = vector.load %arg6[%c0_12, %c0_13] : memref<4x128xf32, #tpu.memory_space<vmem>>, vector<4x128xf32>
    tpu.vector_store %arg6[%c0_12, %c0_13], %15 {strides = array<i32>} : memref<4x128xf32, #tpu.memory_space<vmem>>, vector<4x128xf32>,
    return
  }
  func.func @transform_0(%arg0: i32) -> (i32, i32) {
    %c0_i32 = arith.constant 0 : i32
    %c0_i32_0 = arith.constant 0 : i32
    return %arg0, %c0_i32 : i32, i32
  }
  func.func @transform_1(%arg0: i32) -> (i32, i32) {
    %c0_i32 = arith.constant 0 : i32
    %c0_i32_0 = arith.constant 0 : i32
    %c0_i32_1 = arith.constant 0 : i32
    return %c0_i32, %c0_i32_0 : i32, i32
  }
  func.func @transform_2(%arg0: i32) -> (i32, i32) {
    %c0_i32 = arith.constant 0 : i32
    %c0_i32_0 = arith.constant 0 : i32
    %c0_i32_1 = arith.constant 0 : i32
    return %c0_i32, %c0_i32_0 : i32, i32
  }
  func.func @transform_3(%arg0: i32) -> (i32, i32) {
    %c0_i32 = arith.constant 0 : i32
    %c0_i32_0 = arith.constant 0 : i32
    %c0_i32_1 = arith.constant 0 : i32
    return %c0_i32, %c0_i32_0 : i32, i32
  }
  func.func @transform_4(%arg0: i32) -> (i32, i32) {
    %c0_i32 = arith.constant 0 : i32
    %c0_i32_0 = arith.constant 0 : i32
    %c0_i32_1 = arith.constant 0 : i32
    return %c0_i32, %c0_i32_0 : i32, i32
  }
  func.func @transform_5(%arg0: i32) -> (i32, i32) {
    %c0_i32 = arith.constant 0 : i32
    %c0_i32_0 = arith.constant 0 : i32
    return %arg0, %c0_i32 : i32, i32
  }
}

</mosaic_0001>

<llo_original>
// kernel: kinship_forward.1
$region0: #{kinship_forward.1}
  #allocation0 [shape = 'u32[]', space=smem, size = 0x4, offset = 0x4, fixed_abs, tag = 'smem constant byte address 0x4 - core index']
  #allocation1 [shape = 'u32[144,128]{1,0:T(1,128)}', space=vmem, size = 0x12000, scoped, tag = 'internal scratch']
  %s0 = inlined_call_operand.vmem [shape: bf16[1024,128], index: 0, kind: input, shape index: {}]
  %s1 = inlined_call_operand.vmem [shape: bf16[128,128], index: 1, kind: input, shape index: {}]
  %s2 = inlined_call_operand.vmem [shape: f32[1,128], index: 2, kind: input, shape index: {}]
  %s3 = inlined_call_operand.vmem [shape: bf16[128,128], index: 3, kind: input, shape index: {}]
  %s4 = inlined_call_operand.vmem [shape: f32[1,128], index: 4, kind: input, shape index: {}]
  %s5 = inlined_call_operand.vmem [shape: f32[4,128], index: 5, kind: output, shape index: {}]
  %s6 = sld [smem:[#allocation0]]
  $region30: #{kinship_forward.1} parent=0
    _
  %s8 = ssub.s32 1, %s6
  %s9 = scalar_select 0, %s8, %s6
  // Predicated region
  $region2: #{kinship_forward.1} parent=0 // pred_check
    _
  $region3: #{kinship_forward.1} parent=0 // pred_check_branch
    %11 = sbr.rel (0) target = $region5
  $region4: #{kinship_forward.1} parent=0 // pred_region
    _
  $region5: #{kinship_forward.1} parent=0 // pred_fallthru
    _
  // Predicated region
  $region6: #{kinship_forward.1} parent=0 // pred_check
    _
  $region7: #{kinship_forward.1} parent=0 // pred_check_branch
    %13 = sbr.rel (0) target = $region9
  $region8: #{kinship_forward.1} parent=0 // pred_region
    _
  $region9: #{kinship_forward.1} parent=0 // pred_fallthru
    _
  // Predicated region
  $region10: #{kinship_forward.1} parent=0 // pred_check
    _
  $region11: #{kinship_forward.1} parent=0 // pred_check_branch
    %15 = sbr.rel (0) target = $region13
  $region12: #{kinship_forward.1} parent=0 // pred_region
    _
  $region13: #{kinship_forward.1} parent=0 // pred_fallthru
    _
  // Predicated region
  $region14: #{kinship_forward.1} parent=0 // pred_check
    _
  $region15: #{kinship_forward.1} parent=0 // pred_check_branch
    %17 = sbr.rel (0) target = $region17
  $region16: #{kinship_forward.1} parent=0 // pred_region
    _
  $region17: #{kinship_forward.1} parent=0 // pred_fallthru
    _
  // Predicated region
  $region18: #{kinship_forward.1} parent=0 // pred_check
    _
  $region19: #{kinship_forward.1} parent=0 // pred_check_branch
    %19 = sbr.rel (0) target = $region21
  $region20: #{kinship_forward.1} parent=0 // pred_region
    _
  $region21: #{kinship_forward.1} parent=0 // pred_fallthru
    _
  %v21 = vld [vmem:[%s0] sm:$0xf]
  %v22 = vld [vmem:[%s0 + $0x4] sm:$0xf]
  %v23 = vld [vmem:[%s0 + $0x8] sm:$0xf]
  %v24 = vld [vmem:[%s0 + $0xc] sm:$0xf]
  %v25 = vld [vmem:[%s0 + $0x10] sm:$0xf]
  %v26 = vld [vmem:[%s0 + $0x14] sm:$0xf]
  %v27 = vld [vmem:[%s0 + $0x18] sm:$0xf]
  %v28 = vld [vmem:[%s0 + $0x1c] sm:$0xf]
  %v29 = vld [vmem:[%s0 + $0x20] sm:$0xf]
  %v30 = vld [vmem:[%s0 + $0x24] sm:$0xf]
  %v31 = vld [vmem:[%s0 + $0x28] sm:$0xf]
  %v32 = vld [vmem:[%s0 + $0x2c] sm:$0xf]
  %v33 = vld [vmem:[%s0 + $0x30] sm:$0xf]
  %v34 = vld [vmem:[%s0 + $0x34] sm:$0xf]
  %v35 = vld [vmem:[%s0 + $0x38] sm:$0xf]
  %v36 = vld [vmem:[%s0 + $0x3c] sm:$0xf]
  %v37 = vld [vmem:[%s0 + $0x40] sm:$0xf]
  %v38 = vld [vmem:[%s0 + $0x44] sm:$0xf]
  %v39 = vld [vmem:[%s0 + $0x48] sm:$0xf]
  %v40 = vld [vmem:[%s0 + $0x4c] sm:$0xf]
  %v41 = vld [vmem:[%s0 + $0x50] sm:$0xf]
  %v42 = vld [vmem:[%s0 + $0x54] sm:$0xf]
  %v43 = vld [vmem:[%s0 + $0x58] sm:$0xf]
  %v44 = vld [vmem:[%s0 + $0x5c] sm:$0xf]
  %v45 = vld [vmem:[%s0 + $0x60] sm:$0xf]
  %v46 = vld [vmem:[%s0 + $0x64] sm:$0xf]
  %v47 = vld [vmem:[%s0 + $0x68] sm:$0xf]
  %v48 = vld [vmem:[%s0 + $0x6c] sm:$0xf]
  %v49 = vld [vmem:[%s0 + $0x70] sm:$0xf]
  %v50 = vld [vmem:[%s0 + $0x74] sm:$0xf]
  %v51 = vld [vmem:[%s0 + $0x78] sm:$0xf]
  %v52 = vld [vmem:[%s0 + $0x7c] sm:$0xf]
  %v53 = vld [vmem:[%s0 + $0x80] sm:$0xf]
  %v54 = vld [vmem:[%s0 + $0x84] sm:$0xf]
  %v55 = vld [vmem:[%s0 + $0x88] sm:$0xf]
  %v56 = vld [vmem:[%s0 + $0x8c] sm:$0xf]
  %v57 = vld [vmem:[%s0 + $0x90] sm:$0xf]
  %v58 = vld [vmem:[%s0 + $0x94] sm:$0xf]
  %v59 = vld [vmem:[%s0 + $0x98] sm:$0xf]
  %v60 = vld [vmem:[%s0 + $0x9c] sm:$0xf]
  %v61 = vld [vmem:[%s0 + $0xa0] sm:$0xf]
  %v62 = vld [vmem:[%s0 + $0xa4] sm:$0xf]
  %v63 = vld [vmem:[%s0 + $0xa8] sm:$0xf]
  %v64 = vld [vmem:[%s0 + $0xac] sm:$0xf]
  %v65 = vld [vmem:[%s0 + $0xb0] sm:$0xf]
  %v66 = vld [vmem:[%s0 + $0xb4] sm:$0xf]
  %v67 = vld [vmem:[%s0 + $0xb8] sm:$0xf]
  %v68 = vld [vmem:[%s0 + $0xbc] sm:$0xf]
  %v69 = vld [vmem:[%s0 + $0xc0] sm:$0xf]
  %v70 = vld [vmem:[%s0 + $0xc4] sm:$0xf]
  %v71 = vld [vmem:[%s0 + $0xc8] sm:$0xf]
  %v72 = vld [vmem:[%s0 + $0xcc] sm:$0xf]
  %v73 = vld [vmem:[%s0 + $0xd0] sm:$0xf]
  %v74 = vld [vmem:[%s0 + $0xd4] sm:$0xf]
  %v75 = vld [vmem:[%s0 + $0xd8] sm:$0xf]
  %v76 = vld [vmem:[%s0 + $0xdc] sm:$0xf]
  %v77 = vld [vmem:[%s0 + $0xe0] sm:$0xf]
  %v78 = vld [vmem:[%s0 + $0xe4] sm:$0xf]
  %v79 = vld [vmem:[%s0 + $0xe8] sm:$0xf]
  %v80 = vld [vmem:[%s0 + $0xec] sm:$0xf]
  %v81 = vld [vmem:[%s0 + $0xf0] sm:$0xf]
  %v82 = vld [vmem:[%s0 + $0xf4] sm:$0xf]
  %v83 = vld [vmem:[%s0 + $0xf8] sm:$0xf]
  %v84 = vld [vmem:[%s0 + $0xfc] sm:$0xf]
  %v85 = vld [vmem:[%s0 + $0x100] sm:$0xf]
  %v86 = vld [vmem:[%s0 + $0x104] sm:$0xf]
  %v87 = vld [vmem:[%s0 + $0x108] sm:$0xf]
  %v88 = vld [vmem:[%s0 + $0x10c] sm:$0xf]
  %v89 = vld [vmem:[%s0 + $0x110] sm:$0xf]
  %v90 = vld [vmem:[%s0 + $0x114] sm:$0xf]
  %v91 = vld [vmem:[%s0 + $0x118] sm:$0xf]
  %v92 = vld [vmem:[%s0 + $0x11c] sm:$0xf]
  %v93 = vld [vmem:[%s0 + $0x120] sm:$0xf]
  %v94 = vld [vmem:[%s0 + $0x124] sm:$0xf]
  %v95 = vld [vmem:[%s0 + $0x128] sm:$0xf]
  %v96 = vld [vmem:[%s0 + $0x12c] sm:$0xf]
  %v97 = vld [vmem:[%s0 + $0x130] sm:$0xf]
  %v98 = vld [vmem:[%s0 + $0x134] sm:$0xf]
  %v99 = vld [vmem:[%s0 + $0x138] sm:$0xf]
  %v100 = vld [vmem:[%s0 + $0x13c] sm:$0xf]
  %v101 = vld [vmem:[%s0 + $0x140] sm:$0xf]
  %v102 = vld [vmem:[%s0 + $0x144] sm:$0xf]
  %v103 = vld [vmem:[%s0 + $0x148] sm:$0xf]
  %v104 = vld [vmem:[%s0 + $0x14c] sm:$0xf]
  %v105 = vld [vmem:[%s0 + $0x150] sm:$0xf]
  %v106 = vld [vmem:[%s0 + $0x154] sm:$0xf]
  %v107 = vld [vmem:[%s0 + $0x158] sm:$0xf]
  %v108 = vld [vmem:[%s0 + $0x15c] sm:$0xf]
  %v109 = vld [vmem:[%s0 + $0x160] sm:$0xf]
  %v110 = vld [vmem:[%s0 + $0x164] sm:$0xf]
  %v111 = vld [vmem:[%s0 + $0x168] sm:$0xf]
  %v112 = vld [vmem:[%s0 + $0x16c] sm:$0xf]
  %v113 = vld [vmem:[%s0 + $0x170] sm:$0xf]
  %v114 = vld [vmem:[%s0 + $0x174] sm:$0xf]
  %v115 = vld [vmem:[%s0 + $0x178] sm:$0xf]
  %v116 = vld [vmem:[%s0 + $0x17c] sm:$0xf]
  %v117 = vld [vmem:[%s0 + $0x180] sm:$0xf]
  %v118 = vld [vmem:[%s0 + $0x184] sm:$0xf]
  %v119 = vld [vmem:[%s0 + $0x188] sm:$0xf]
  %v120 = vld [vmem:[%s0 + $0x18c] sm:$0xf]
  %v121 = vld [vmem:[%s0 + $0x190] sm:$0xf]
  %v122 = vld [vmem:[%s0 + $0x194] sm:$0xf]
  %v123 = vld [vmem:[%s0 + $0x198] sm:$0xf]
  %v124 = vld [vmem:[%s0 + $0x19c] sm:$0xf]
  %v125 = vld [vmem:[%s0 + $0x1a0] sm:$0xf]
  %v126 = vld [vmem:[%s0 + $0x1a4] sm:$0xf]
  %v127 = vld [vmem:[%s0 + $0x1a8] sm:$0xf]
  %v128 = vld [vmem:[%s0 + $0x1ac] sm:$0xf]
  %v129 = vld [vmem:[%s0 + $0x1b0] sm:$0xf]
  %v130 = vld [vmem:[%s0 + $0x1b4] sm:$0xf]
  %v131 = vld [vmem:[%s0 + $0x1b8] sm:$0xf]
  %v132 = vld [vmem:[%s0 + $0x1bc] sm:$0xf]
  %v133 = vld [vmem:[%s0 + $0x1c0] sm:$0xf]
  %v134 = vld [vmem:[%s0 + $0x1c4] sm:$0xf]
  %v135 = vld [vmem:[%s0 + $0x1c8] sm:$0xf]
  %v136 = vld [vmem:[%s0 + $0x1cc] sm:$0xf]
  %v137 = vld [vmem:[%s0 + $0x1d0] sm:$0xf]
  %v138 = vld [vmem:[%s0 + $0x1d4] sm:$0xf]
  %v139 = vld [vmem:[%s0 + $0x1d8] sm:$0xf]
  %v140 = vld [vmem:[%s0 + $0x1dc] sm:$0xf]
  %v141 = vld [vmem:[%s0 + $0x1e0] sm:$0xf]
  %v142 = vld [vmem:[%s0 + $0x1e4] sm:$0xf]
  %v143 = vld [vmem:[%s0 + $0x1e8] sm:$0xf]
  %v144 = vld [vmem:[%s0 + $0x1ec] sm:$0xf]
  %v145 = vld [vmem:[%s0 + $0x1f0] sm:$0xf]
  %v146 = vld [vmem:[%s0 + $0x1f4] sm:$0xf]
  %v147 = vld [vmem:[%s0 + $0x1f8] sm:$0xf]
  %v148 = vld [vmem:[%s0 + $0x1fc] sm:$0xf]
  %v149 = vld [vmem:[%s1] sm:$0xf]
  %v150 = vld [vmem:[%s1 + $0x4] sm:$0xf]
  %v151 = vld [vmem:[%s1 + $0x8] sm:$0xf]
  %v152 = vld [vmem:[%s1 + $0xc] sm:$0xf]
  %v153 = vld [vmem:[%s1 + $0x10] sm:$0xf]
  %v154 = vld [vmem:[%s1 + $0x14] sm:$0xf]
  %v155 = vld [vmem:[%s1 + $0x18] sm:$0xf]
  %v156 = vld [vmem:[%s1 + $0x1c] sm:$0xf]
  %v157 = vld [vmem:[%s1 + $0x20] sm:$0xf]
  %v158 = vld [vmem:[%s1 + $0x24] sm:$0xf]
  %v159 = vld [vmem:[%s1 + $0x28] sm:$0xf]
  %v160 = vld [vmem:[%s1 + $0x2c] sm:$0xf]
  %v161 = vld [vmem:[%s1 + $0x30] sm:$0xf]
  %v162 = vld [vmem:[%s1 + $0x34] sm:$0xf]
  %v163 = vld [vmem:[%s1 + $0x38] sm:$0xf]
  %v164 = vld [vmem:[%s1 + $0x3c] sm:$0xf]
  %v165 = vld [vmem:[%s2] sm:$0x1]
  %v167 = vlaneseq
  %v168 = vshrl.u32 %v167, 7
  %v169 = vsub.s32 0, %v168
  %v170 = vrot.slane %v165, %v169
  %v300 = vunpack.c.l.b16 %v21
  %v301 = vunpack.c.l.b16 %v22
  %v302 = vunpack.c.l.b16 %v23
  %v303 = vunpack.c.l.b16 %v24
  %v304 = vunpack.c.l.b16 %v25
  %v305 = vunpack.c.l.b16 %v26
  %v306 = vunpack.c.l.b16 %v27
  %v307 = vunpack.c.l.b16 %v28
  %v308 = vunpack.c.l.b16 %v29
  %v309 = vunpack.c.l.b16 %v30
  %v310 = vunpack.c.l.b16 %v31
  %v311 = vunpack.c.l.b16 %v32
  %v312 = vunpack.c.l.b16 %v33
  %v313 = vunpack.c.l.b16 %v34
  %v314 = vunpack.c.l.b16 %v35
  %v315 = vunpack.c.l.b16 %v36
  %v316 = vunpack.c.l.b16 %v37
  %v317 = vunpack.c.l.b16 %v38
  %v318 = vunpack.c.l.b16 %v39
  %v319 = vunpack.c.l.b16 %v40
  %v320 = vunpack.c.l.b16 %v41
  %v321 = vunpack.c.l.b16 %v42
  %v322 = vunpack.c.l.b16 %v43
  %v323 = vunpack.c.l.b16 %v44
  %v324 = vunpack.c.l.b16 %v45
  %v325 = vunpack.c.l.b16 %v46
  %v326 = vunpack.c.l.b16 %v47
  %v327 = vunpack.c.l.b16 %v48
  %v328 = vunpack.c.l.b16 %v49
  %v329 = vunpack.c.l.b16 %v50
  %v330 = vunpack.c.l.b16 %v51
  %v331 = vunpack.c.l.b16 %v52
  %v332 = vunpack.c.l.b16 %v53
  %v333 = vunpack.c.l.b16 %v54
  %v334 = vunpack.c.l.b16 %v55
  %v335 = vunpack.c.l.b16 %v56
  %v336 = vunpack.c.l.b16 %v57
  %v337 = vunpack.c.l.b16 %v58
  %v338 = vunpack.c.l.b16 %v59
  %v339 = vunpack.c.l.b16 %v60
  %v340 = vunpack.c.l.b16 %v61
  %v341 = vunpack.c.l.b16 %v62
  %v342 = vunpack.c.l.b16 %v63
  %v343 = vunpack.c.l.b16 %v64
  %v344 = vunpack.c.l.b16 %v65
  %v345 = vunpack.c.l.b16 %v66
  %v346 = vunpack.c.l.b16 %v67
  %v347 = vunpack.c.l.b16 %v68
  %v348 = vunpack.c.l.b16 %v69
  %v349 = vunpack.c.l.b16 %v70
  %v350 = vunpack.c.l.b16 %v71
  %v351 = vunpack.c.l.b16 %v72
  %v352 = vunpack.c.l.b16 %v73
  %v353 = vunpack.c.l.b16 %v74
  %v354 = vunpack.c.l.b16 %v75
  %v355 = vunpack.c.l.b16 %v76
  %v356 = vunpack.c.l.b16 %v77
  %v357 = vunpack.c.l.b16 %v78
  %v358 = vunpack.c.l.b16 %v79
  %v359 = vunpack.c.l.b16 %v80
  %v360 = vunpack.c.l.b16 %v81
  %v361 = vunpack.c.l.b16 %v82
  %v362 = vunpack.c.l.b16 %v83
  %v363 = vunpack.c.l.b16 %v84
  %v364 = vunpack.c.l.b16 %v85
  %v365 = vunpack.c.l.b16 %v86
  %v366 = vunpack.c.l.b16 %v87
  %v367 = vunpack.c.l.b16 %v88
  %v368 = vunpack.c.l.b16 %v89
  %v369 = vunpack.c.l.b16 %v90
  %v370 = vunpack.c.l.b16 %v91
  %v371 = vunpack.c.l.b16 %v92
  %v372 = vunpack.c.l.b16 %v93
  %v373 = vunpack.c.l.b16 %v94
  %v374 = vunpack.c.l.b16 %v95
  %v375 = vunpack.c.l.b16 %v96
  %v376 = vunpack.c.l.b16 %v97
  %v377 = vunpack.c.l.b16 %v98
  %v378 = vunpack.c.l.b16 %v99
  %v379 = vunpack.c.l.b16 %v100
  %v380 = vunpack.c.l.b16 %v101
  %v381 = vunpack.c.l.b16 %v102
  %v382 = vunpack.c.l.b16 %v103
  %v383 = vunpack.c.l.b16 %v104
  %v384 = vunpack.c.l.b16 %v105
  %v385 = vunpack.c.l.b16 %v106
  %v386 = vunpack.c.l.b16 %v107
  %v387 = vunpack.c.l.b16 %v108
  %v388 = vunpack.c.l.b16 %v109
  %v389 = vunpack.c.l.b16 %v110
  %v390 = vunpack.c.l.b16 %v111
  %v391 = vunpack.c.l.b16 %v112
  %v392 = vunpack.c.l.b16 %v113
  %v393 = vunpack.c.l.b16 %v114
  %v394 = vunpack.c.l.b16 %v115
  %v395 = vunpack.c.l.b16 %v116
  %v396 = vunpack.c.l.b16 %v117
  %v397 = vunpack.c.l.b16 %v118
  %v398 = vunpack.c.l.b16 %v119
  %v399 = vunpack.c.l.b16 %v120
  %v400 = vunpack.c.l.b16 %v121
  %v401 = vunpack.c.l.b16 %v122
  %v402 = vunpack.c.l.b16 %v123
  %v403 = vunpack.c.l.b16 %v124
  %v404 = vunpack.c.l.b16 %v125
  %v405 = vunpack.c.l.b16 %v126
  %v406 = vunpack.c.l.b16 %v127
  %v407 = vunpack.c.l.b16 %v128
  %v408 = vunpack.c.l.b16 %v129
  %v409 = vunpack.c.l.b16 %v130
  %v410 = vunpack.c.l.b16 %v131
  %v411 = vunpack.c.l.b16 %v132
  %v412 = vunpack.c.l.b16 %v133
  %v413 = vunpack.c.l.b16 %v134
  %v414 = vunpack.c.l.b16 %v135
  %v415 = vunpack.c.l.b16 %v136
  %v416 = vunpack.c.l.b16 %v137
  %v417 = vunpack.c.l.b16 %v138
  %v418 = vunpack.c.l.b16 %v139
  %v419 = vunpack.c.l.b16 %v140
  %v420 = vunpack.c.l.b16 %v141
  %v421 = vunpack.c.l.b16 %v142
  %v422 = vunpack.c.l.b16 %v143
  %v423 = vunpack.c.l.b16 %v144
  %v424 = vunpack.c.l.b16 %v145
  %v425 = vunpack.c.l.b16 %v146
  %v426 = vunpack.c.l.b16 %v147
  %v427 = vunpack.c.l.b16 %v148
  %v428 = vpack.c.b16 %v301, %v300
  %v429 = vpack.c.b16 %v303, %v302
  %v430 = vpack.c.b16 %v305, %v304
  %v431 = vpack.c.b16 %v307, %v306
  %v432 = vpack.c.b16 %v309, %v308
  %v433 = vpack.c.b16 %v311, %v310
  %v434 = vpack.c.b16 %v313, %v312
  %v435 = vpack.c.b16 %v315, %v314
  %v436 = vpack.c.b16 %v317, %v316
  %v437 = vpack.c.b16 %v319, %v318
  %v438 = vpack.c.b16 %v321, %v320
  %v439 = vpack.c.b16 %v323, %v322
  %v440 = vpack.c.b16 %v325, %v324
  %v441 = vpack.c.b16 %v327, %v326
  %v442 = vpack.c.b16 %v329, %v328
  %v443 = vpack.c.b16 %v331, %v330
  %v444 = vpack.c.b16 %v333, %v332
  %v445 = vpack.c.b16 %v335, %v334
  %v446 = vpack.c.b16 %v337, %v336
  %v447 = vpack.c.b16 %v339, %v338
  %v448 = vpack.c.b16 %v341, %v340
  %v449 = vpack.c.b16 %v343, %v342
  %v450 = vpack.c.b16 %v345, %v344
  %v451 = vpack.c.b16 %v347, %v346
  %v452 = vpack.c.b16 %v349, %v348
  %v453 = vpack.c.b16 %v351, %v350
  %v454 = vpack.c.b16 %v353, %v352
  %v455 = vpack.c.b16 %v355, %v354
  %v456 = vpack.c.b16 %v357, %v356
  %v457 = vpack.c.b16 %v359, %v358
  %v458 = vpack.c.b16 %v361, %v360
  %v459 = vpack.c.b16 %v363, %v362
  %v460 = vpack.c.b16 %v365, %v364
  %v461 = vpack.c.b16 %v367, %v366
  %v462 = vpack.c.b16 %v369, %v368
  %v463 = vpack.c.b16 %v371, %v370
  %v464 = vpack.c.b16 %v373, %v372
  %v465 = vpack.c.b16 %v375, %v374
  %v466 = vpack.c.b16 %v377, %v376
  %v467 = vpack.c.b16 %v379, %v378
  %v468 = vpack.c.b16 %v381, %v380
  %v469 = vpack.c.b16 %v383, %v382
  %v470 = vpack.c.b16 %v385, %v384
  %v471 = vpack.c.b16 %v387, %v386
  %v472 = vpack.c.b16 %v389, %v388
  %v473 = vpack.c.b16 %v391, %v390
  %v474 = vpack.c.b16 %v393, %v392
  %v475 = vpack.c.b16 %v395, %v394
  %v476 = vpack.c.b16 %v397, %v396
  %v477 = vpack.c.b16 %v399, %v398
  %v478 = vpack.c.b16 %v401, %v400
  %v479 = vpack.c.b16 %v403, %v402
  %v480 = vpack.c.b16 %v405, %v404
  %v481 = vpack.c.b16 %v407, %v406
  %v482 = vpack.c.b16 %v409, %v408
  %v483 = vpack.c.b16 %v411, %v410
  %v484 = vpack.c.b16 %v413, %v412
  %v485 = vpack.c.b16 %v415, %v414
  %v486 = vpack.c.b16 %v417, %v416
  %v487 = vpack.c.b16 %v419, %v418
  %v488 = vpack.c.b16 %v421, %v420
  %v489 = vpack.c.b16 %v423, %v422
  %v490 = vpack.c.b16 %v425, %v424
  %v491 = vpack.c.b16 %v427, %v426
  %v572 = vunpack.c.l.b16 %v149
  %v573 = vunpack.c.l.b16 %v150
  %v574 = vunpack.c.l.b16 %v151
  %v575 = vunpack.c.l.b16 %v152
  %v576 = vunpack.c.l.b16 %v153
  %v577 = vunpack.c.l.b16 %v154
  %v578 = vunpack.c.l.b16 %v155
  %v579 = vunpack.c.l.b16 %v156
  %v580 = vunpack.c.l.b16 %v157
  %v581 = vunpack.c.l.b16 %v158
  %v582 = vunpack.c.l.b16 %v159
  %v583 = vunpack.c.l.b16 %v160
  %v584 = vunpack.c.l.b16 %v161
  %v585 = vunpack.c.l.b16 %v162
  %v586 = vunpack.c.l.b16 %v163
  %v587 = vunpack.c.l.b16 %v164
  %v588 = vpack.c.b16 %v573, %v572
  %v589 = vpack.c.b16 %v575, %v574
  %v590 = vpack.c.b16 %v577, %v576
  %v591 = vpack.c.b16 %v579, %v578
  %v592 = vpack.c.b16 %v581, %v580
  %v593 = vpack.c.b16 %v583, %v582
  %v594 = vpack.c.b16 %v585, %v584
  %v595 = vpack.c.b16 %v587, %v586
  %604 = vmatprep.subr.bf16.mxu0 0
  %605 = vmatpush1.bf16.msra.mxu0 %v588
  %606 = vmatprep.subr.bf16.mxu0 0
  %607 = vmatpush1.bf16.msra.mxu0 %v589
  %608 = vmatprep.subr.bf16.mxu0 0
  %609 = vmatpush1.bf16.msra.mxu0 %v590
  %610 = vmatprep.subr.bf16.mxu0 0
  %611 = vmatpush1.bf16.msra.mxu0 %v591
  %612 = vmatprep.subr.bf16.mxu0 0
  %613 = vmatpush1.bf16.msra.mxu0 %v592
  %614 = vmatprep.subr.bf16.mxu0 0
  %615 = vmatpush1.bf16.msra.mxu0 %v593
  %616 = vmatprep.subr.bf16.mxu0 0
  %617 = vmatpush1.bf16.msra.mxu0 %v594
  %618 = vmatprep.subr.bf16.mxu0 0
  %619 = vmatpush1.bf16.msra.mxu0 %v595
  %620 = vmatprep.subr.bf16.mxu0 0
  %621 = vmatpush1.bf16.msra.mxu0 0
  %622 = vmatprep.subr.bf16.mxu0 0
  %623 = vmatpush1.bf16.msra.mxu0 0
  %624 = vmatprep.subr.bf16.mxu0 0
  %625 = vmatpush1.bf16.msra.mxu0 0
  %626 = vmatprep.subr.bf16.mxu0 0
  %627 = vmatpush1.bf16.msra.mxu0 0
  %628 = vmatprep.subr.bf16.mxu0 0
  %629 = vmatpush1.bf16.msra.mxu0 0
  %630 = vmatprep.subr.bf16.mxu0 0
  %631 = vmatpush1.bf16.msra.mxu0 0
  %632 = vmatprep.subr.bf16.mxu0 0
  %633 = vmatpush1.bf16.msra.mxu0 0
  %634 = vmatprep.subr.bf16.mxu0 0
  %635 = vmatpush1.bf16.msra.mxu0 0
  %636 = vmatprep.mubr.bf16.mxu0 0
  %637 = vmatmul.mubr.bf16.gmra.mrb[0].mxu0 %v428
  %v638 = vpop.f32.mrb[0].mxu0
  %v639 = vadd.f32 %v170, %v638
  %v640 = vpop.f32.mrb[0].mxu0
  %v641 = vpop.f32.mrb[0].mxu0
  %v642 = vadd.f32 %v170, %v641
  %v643 = vpop.f32.mrb[0].mxu0
  %644 = vmatprep.mubr.bf16.mxu0 0
  %645 = vmatmul.mubr.bf16.gmra.mrb[0].mxu0 %v429
  %v646 = vpop.f32.mrb[0].mxu0
  %v647 = vadd.f32 %v170, %v646
  %v648 = vpop.f32.mrb[0].mxu0
  %v649 = vpop.f32.mrb[0].mxu0
  %v650 = vadd.f32 %v170, %v649
  %v651 = vpop.f32.mrb[0].mxu0
  %652 = vmatprep.mubr.bf16.mxu0 0
  %653 = vmatmul.mubr.bf16.gmra.mrb[0].mxu0 %v430
  %v654 = vpop.f32.mrb[0].mxu0
  %v655 = vadd.f32 %v170, %v654
  %v656 = vpop.f32.mrb[0].mxu0
  %v657 = vpop.f32.mrb[0].mxu0
  %v658 = vadd.f32 %v170, %v657
  %v659 = vpop.f32.mrb[0].mxu0
  %660 = vmatprep.mubr.bf16.mxu0 0
  %661 = vmatmul.mubr.bf16.gmra.mrb[0].mxu0 %v431
  %v662 = vpop.f32.mrb[0].mxu0
  %v663 = vadd.f32 %v170, %v662
  %v664 = vpop.f32.mrb[0].mxu0
  %v665 = vpop.f32.mrb[0].mxu0
  %v666 = vadd.f32 %v170, %v665
  %v667 = vpop.f32.mrb[0].mxu0
  %668 = vmatprep.mubr.bf16.mxu0 0
  %669 = vmatmul.mubr.bf16.gmra.mrb[0].mxu0 %v432
  %v670 = vpop.f32.mrb[0].mxu0
  %v671 = vadd.f32 %v170, %v670
  %v672 = vpop.f32.mrb[0].mxu0
  %v673 = vpop.f32.mrb[0].mxu0
  %v674 = vadd.f32 %v170, %v673
  %v675 = vpop.f32.mrb[0].mxu0
  %676 = vmatprep.mubr.bf16.mxu0 0
  %677 = vmatmul.mubr.bf16.gmra.mrb[0].mxu0 %v433
  %v678 = vpop.f32.mrb[0].mxu0
  %v679 = vadd.f32 %v170, %v678
  %v680 = vpop.f32.mrb[0].mxu0
  %v681 = vpop.f32.mrb[0].mxu0
  %v682 = vadd.f32 %v170, %v681
  %v683 = vpop.f32.mrb[0].mxu0
  %684 = vmatprep.mubr.bf16.mxu0 0
  %685 = vmatmul.mubr.bf16.gmra.mrb[0].mxu0 %v434
  %v686 = vpop.f32.mrb[0].mxu0
  %v687 = vadd.f32 %v170, %v686
  %v688 = vpop.f32.mrb[0].mxu0
  %v689 = vpop.f32.mrb[0].mxu0
  %v690 = vadd.f32 %v170, %v689
  %v691 = vpop.f32.mrb[0].mxu0
  %692 = vmatprep.mubr.bf16.mxu0 0
  %693 = vmatmul.mubr.bf16.gmra.mrb[0].mxu0 %v435
  %v694 = vpop.f32.mrb[0].mxu0
  %v695 = vadd.f32 %v170, %v694
  %v696 = vpop.f32.mrb[0].mxu0
  %v697 = vpop.f32.mrb[0].mxu0
  %v698 = vadd.f32 %v170, %v697
  %v699 = vpop.f32.mrb[0].mxu0
  %700 = vmatprep.mubr.bf16.mxu0 0
  %701 = vmatmul.mubr.bf16.gmra.mrb[0].mxu0 %v436
  %v702 = vpop.f32.mrb[0].mxu0
  %v703 = vadd.f32 %v170, %v702
  %v704 = vpop.f32.mrb[0].mxu0
  %v705 = vpop.f32.mrb[0].mxu0
  %v706 = vadd.f32 %v170, %v705
  %v707 = vpop.f32.mrb[0].mxu0
  %708 = vmatprep.mubr.bf16.mxu0 0
  %709 = vmatmul.mubr.bf16.gmra.mrb[0].mxu0 %v437
  %v710 = vpop.f32.mrb[0].mxu0
  %v711 = vadd.f32 %v170, %v710
  %v712 = vpop.f32.mrb[0].mxu0
  %v713 = vpop.f32.mrb[0].mxu0
  %v714 = vadd.f32 %v170, %v713
  %v715 = vpop.f32.mrb[0].mxu0
  %716 = vmatprep.mubr.bf16.mxu0 0
  %717 = vmatmul.mubr.bf16.gmra.mrb[0].mxu0 %v438
  %v718 = vpop.f32.mrb[0].mxu0
  %v719 = vadd.f32 %v170, %v718
  %v720 = vpop.f32.mrb[0].mxu0
  %v721 = vpop.f32.mrb[0].mxu0
  %v722 = vadd.f32 %v170, %v721
  %v723 = vpop.f32.mrb[0].mxu0
  %724 = vmatprep.mubr.bf16.mxu0 0
  %725 = vmatmul.mubr.bf16.gmra.mrb[0].mxu0 %v439
  %v726 = vpop.f32.mrb[0].mxu0
  %v727 = vadd.f32 %v170, %v726
  %v728 = vpop.f32.mrb[0].mxu0
  %v729 = vpop.f32.mrb[0].mxu0
  %v730 = vadd.f32 %v170, %v729
  %v731 = vpop.f32.mrb[0].mxu0
  %732 = vmatprep.mubr.bf16.mxu0 0
  %733 = vmatmul.mubr.bf16.gmra.mrb[0].mxu0 %v440
  %v734 = vpop.f32.mrb[0].mxu0
  %v735 = vadd.f32 %v170, %v734
  %v736 = vpop.f32.mrb[0].mxu0
  %v737 = vpop.f32.mrb[0].mxu0
  %v738 = vadd.f32 %v170, %v737
  %v739 = vpop.f32.mrb[0].mxu0
  %740 = vmatprep.mubr.bf16.mxu0 0
  %741 = vmatmul.mubr.bf16.gmra.mrb[0].mxu0 %v441
  %v742 = vpop.f32.mrb[0].mxu0
  %v743 = vadd.f32 %v170, %v742
  %v744 = vpop.f32.mrb[0].mxu0
  %v745 = vpop.f32.mrb[0].mxu0
  %v746 = vadd.f32 %v170, %v745
  %v747 = vpop.f32.mrb[0].mxu0
  %748 = vmatprep.mubr.bf16.mxu0 0
  %749 = vmatmul.mubr.bf16.gmra.mrb[0].mxu0 %v442
  %v750 = vpop.f32.mrb[0].mxu0
  %v751 = vadd.f32 %v170, %v750
  %v752 = vpop.f32.mrb[0].mxu0
  %v753 = vpop.f32.mrb[0].mxu0
  %v754 = vadd.f32 %v170, %v753
  %v755 = vpop.f32.mrb[0].mxu0
  %756 = vmatprep.mubr.bf16.mxu0 0
  %757 = vmatmul.mubr.bf16.gmra.mrb[0].mxu0 %v443
  %v758 = vpop.f32.mrb[0].mxu0
  %v759 = vadd.f32 %v170, %v758
  %v760 = vpop.f32.mrb[0].mxu0
  %v761 = vpop.f32.mrb[0].mxu0
  %v762 = vadd.f32 %v170, %v761
  %v763 = vpop.f32.mrb[0].mxu0
  %764 = vmatprep.mubr.bf16.mxu0 0
  %765 = vmatmul.mubr.bf16.gmra.mrb[0].mxu0 %v444
  %v766 = vpop.f32.mrb[0].mxu0
  %v767 = vadd.f32 %v170, %v766
  %v768 = vpop.f32.mrb[0].mxu0
  %v769 = vpop.f32.mrb[0].mxu0
  %v770 = vadd.f32 %v170, %v769
  %v771 = vpop.f32.mrb[0].mxu0
  %772 = vmatprep.mubr.bf16.mxu0 0
  %773 = vmatmul.mubr.bf16.gmra.mrb[0].mxu0 %v445
  %v774 = vpop.f32.mrb[0].mxu0
  %v775 = vadd.f32 %v170, %v774
  %v776 = vpop.f32.mrb[0].mxu0
  %v777 = vpop.f32.mrb[0].mxu0
  %v778 = vadd.f32 %v170, %v777
  %v779 = vpop.f32.mrb[0].mxu0
  %780 = vmatprep.mubr.bf16.mxu0 0
  %781 = vmatmul.mubr.bf16.gmra.mrb[0].mxu0 %v446
  %v782 = vpop.f32.mrb[0].mxu0
  %v783 = vadd.f32 %v170, %v782
  %v784 = vpop.f32.mrb[0].mxu0
  %v785 = vpop.f32.mrb[0].mxu0
  %v786 = vadd.f32 %v170, %v785
  %v787 = vpop.f32.mrb[0].mxu0
  %788 = vmatprep.mubr.bf16.mxu0 0
  %789 = vmatmul.mubr.bf16.gmra.mrb[0].mxu0 %v447
  %v790 = vpop.f32.mrb[0].mxu0
  %v791 = vadd.f32 %v170, %v790
  %v792 = vpop.f32.mrb[0].mxu0
  %v793 = vpop.f32.mrb[0].mxu0
  %v794 = vadd.f32 %v170, %v793
  %v795 = vpop.f32.mrb[0].mxu0
  %796 = vmatprep.mubr.bf16.mxu0 0
  %797 = vmatmul.mubr.bf16.gmra.mrb[0].mxu0 %v448
  %v798 = vpop.f32.mrb[0].mxu0
  %v799 = vadd.f32 %v170, %v798
  %v800 = vpop.f32.mrb[0].mxu0
  %v801 = vpop.f32.mrb[0].mxu0
  %v802 = vadd.f32 %v170, %v801
  %v803 = vpop.f32.mrb[0].mxu0
  %804 = vmatprep.mubr.bf16.mxu0 0
  %805 = vmatmul.mubr.bf16.gmra.mrb[0].mxu0 %v449
  %v806 = vpop.f32.mrb[0].mxu0
  %v807 = vadd.f32 %v170, %v806
  %v808 = vpop.f32.mrb[0].mxu0
  %v809 = vpop.f32.mrb[0].mxu0
  %v810 = vadd.f32 %v170, %v809
  %v811 = vpop.f32.mrb[0].mxu0
  %812 = vmatprep.mubr.bf16.mxu0 0
  %813 = vmatmul.mubr.bf16.gmra.mrb[0].mxu0 %v450
  %v814 = vpop.f32.mrb[0].mxu0
  %v815 = vadd.f32 %v170, %v814
  %v816 = vpop.f32.mrb[0].mxu0
  %v817 = vpop.f32.mrb[0].mxu0
  %v818 = vadd.f32 %v170, %v817
  %v819 = vpop.f32.mrb[0].mxu0
  %820 = vmatprep.mubr.bf16.mxu0 0
  %821 = vmatmul.mubr.bf16.gmra.mrb[0].mxu0 %v451
  %v822 = vpop.f32.mrb[0].mxu0
  %v823 = vadd.f32 %v170, %v822
  %v824 = vpop.f32.mrb[0].mxu0
  %v825 = vpop.f32.mrb[0].mxu0
  %v826 = vadd.f32 %v170, %v825
  %v827 = vpop.f32.mrb[0].mxu0
  %828 = vmatprep.mubr.bf16.mxu0 0
  %829 = vmatmul.mubr.bf16.gmra.mrb[0].mxu0 %v452
  %v830 = vpop.f32.mrb[0].mxu0
  %v831 = vadd.f32 %v170, %v830
  %v832 = vpop.f32.mrb[0].mxu0
  %v833 = vpop.f32.mrb[0].mxu0
  %v834 = vadd.f32 %v170, %v833
  %v835 = vpop.f32.mrb[0].mxu0
  %836 = vmatprep.mubr.bf16.mxu0 0
  %837 = vmatmul.mubr.bf16.gmra.mrb[0].mxu0 %v453
  %v838 = vpop.f32.mrb[0].mxu0
  %v839 = vadd.f32 %v170, %v838
  %v840 = vpop.f32.mrb[0].mxu0
  %v841 = vpop.f32.mrb[0].mxu0
  %v842 = vadd.f32 %v170, %v841
  %v843 = vpop.f32.mrb[0].mxu0
  %844 = vmatprep.mubr.bf16.mxu0 0
  %845 = vmatmul.mubr.bf16.gmra.mrb[0].mxu0 %v454
  %v846 = vpop.f32.mrb[0].mxu0
  %v847 = vadd.f32 %v170, %v846
  %v848 = vpop.f32.mrb[0].mxu0
  %v849 = vpop.f32.mrb[0].mxu0
  %v850 = vadd.f32 %v170, %v849
  %v851 = vpop.f32.mrb[0].mxu0
  %852 = vmatprep.mubr.bf16.mxu0 0
  %853 = vmatmul.mubr.bf16.gmra.mrb[0].mxu0 %v455
  %v854 = vpop.f32.mrb[0].mxu0
  %v855 = vadd.f32 %v170, %v854
  %v856 = vpop.f32.mrb[0].mxu0
  %v857 = vpop.f32.mrb[0].mxu0
  %v858 = vadd.f32 %v170, %v857
  %v859 = vpop.f32.mrb[0].mxu0
  %860 = vmatprep.mubr.bf16.mxu0 0
  %861 = vmatmul.mubr.bf16.gmra.mrb[0].mxu0 %v456
  %v862 = vpop.f32.mrb[0].mxu0
  %v863 = vadd.f32 %v170, %v862
  %v864 = vpop.f32.mrb[0].mxu0
  %v865 = vpop.f32.mrb[0].mxu0
  %v866 = vadd.f32 %v170, %v865
  %v867 = vpop.f32.mrb[0].mxu0
  %868 = vmatprep.mubr.bf16.mxu0 0
  %869 = vmatmul.mubr.bf16.gmra.mrb[0].mxu0 %v457
  %v870 = vpop.f32.mrb[0].mxu0
  %v871 = vadd.f32 %v170, %v870
  %v872 = vpop.f32.mrb[0].mxu0
  %v873 = vpop.f32.mrb[0].mxu0
  %v874 = vadd.f32 %v170, %v873
  %v875 = vpop.f32.mrb[0].mxu0
  %876 = vmatprep.mubr.bf16.mxu0 0
  %877 = vmatmul.mubr.bf16.gmra.mrb[0].mxu0 %v458
  %v878 = vpop.f32.mrb[0].mxu0
  %v879 = vadd.f32 %v170, %v878
  %v880 = vpop.f32.mrb[0].mxu0
  %v881 = vpop.f32.mrb[0].mxu0
  %v882 = vadd.f32 %v170, %v881
  %v883 = vpop.f32.mrb[0].mxu0
  %884 = vmatprep.mubr.bf16.mxu0 0
  %885 = vmatmul.mubr.bf16.gmra.mrb[0].mxu0 %v459
  %v886 = vpop.f32.mrb[0].mxu0
  %v887 = vadd.f32 %v170, %v886
  %v888 = vpop.f32.mrb[0].mxu0
  %v889 = vpop.f32.mrb[0].mxu0
  %v890 = vadd.f32 %v170, %v889
  %v891 = vpop.f32.mrb[0].mxu0
  %892 = vmatprep.mubr.bf16.mxu0 0
  %893 = vmatmul.mubr.bf16.gmra.mrb[0].mxu0 %v460
  %v894 = vpop.f32.mrb[0].mxu0
  %v895 = vadd.f32 %v170, %v894
  %v896 = vpop.f32.mrb[0].mxu0
  %v897 = vpop.f32.mrb[0].mxu0
  %v898 = vadd.f32 %v170, %v897
  %v899 = vpop.f32.mrb[0].mxu0
  %900 = vmatprep.mubr.bf16.mxu0 0
  %901 = vmatmul.mubr.bf16.gmra.mrb[0].mxu0 %v461
  %v902 = vpop.f32.mrb[0].mxu0
  %v903 = vadd.f32 %v170, %v902
  %v904 = vpop.f32.mrb[0].mxu0
  %v905 = vpop.f32.mrb[0].mxu0
  %v906 = vadd.f32 %v170, %v905
  %v907 = vpop.f32.mrb[0].mxu0
  %908 = vmatprep.mubr.bf16.mxu0 0
  %909 = vmatmul.mubr.bf16.gmra.mrb[0].mxu0 %v462
  %v910 = vpop.f32.mrb[0].mxu0
  %v911 = vadd.f32 %v170, %v910
  %v912 = vpop.f32.mrb[0].mxu0
  %v913 = vpop.f32.mrb[0].mxu0
  %v914 = vadd.f32 %v170, %v913
  %v915 = vpop.f32.mrb[0].mxu0
  %916 = vmatprep.mubr.bf16.mxu0 0
  %917 = vmatmul.mubr.bf16.gmra.mrb[0].mxu0 %v463
  %v918 = vpop.f32.mrb[0].mxu0
  %v919 = vadd.f32 %v170, %v918
  %v920 = vpop.f32.mrb[0].mxu0
  %v921 = vpop.f32.mrb[0].mxu0
  %v922 = vadd.f32 %v170, %v921
  %v923 = vpop.f32.mrb[0].mxu0
  %924 = vmatprep.mubr.bf16.mxu0 0
  %925 = vmatmul.mubr.bf16.gmra.mrb[0].mxu0 %v464
  %v926 = vpop.f32.mrb[0].mxu0
  %v927 = vadd.f32 %v170, %v926
  %v928 = vpop.f32.mrb[0].mxu0
  %v929 = vpop.f32.mrb[0].mxu0
  %v930 = vadd.f32 %v170, %v929
  %v931 = vpop.f32.mrb[0].mxu0
  %932 = vmatprep.mubr.bf16.mxu0 0
  %933 = vmatmul.mubr.bf16.gmra.mrb[0].mxu0 %v465
  %v934 = vpop.f32.mrb[0].mxu0
  %v935 = vadd.f32 %v170, %v934
  %v936 = vpop.f32.mrb[0].mxu0
  %v937 = vpop.f32.mrb[0].mxu0
  %v938 = vadd.f32 %v170, %v937
  %v939 = vpop.f32.mrb[0].mxu0
  %940 = vmatprep.mubr.bf16.mxu0 0
  %941 = vmatmul.mubr.bf16.gmra.mrb[0].mxu0 %v466
  %v942 = vpop.f32.mrb[0].mxu0
  %v943 = vadd.f32 %v170, %v942
  %v944 = vpop.f32.mrb[0].mxu0
  %v945 = vpop.f32.mrb[0].mxu0
  %v946 = vadd.f32 %v170, %v945
  %v947 = vpop.f32.mrb[0].mxu0
  %948 = vmatprep.mubr.bf16.mxu0 0
  %949 = vmatmul.mubr.bf16.gmra.mrb[0].mxu0 %v467
  %v950 = vpop.f32.mrb[0].mxu0
  %v951 = vadd.f32 %v170, %v950
  %v952 = vpop.f32.mrb[0].mxu0
  %v953 = vpop.f32.mrb[0].mxu0
  %v954 = vadd.f32 %v170, %v953
  %v955 = vpop.f32.mrb[0].mxu0
  %956 = vmatprep.mubr.bf16.mxu0 0
  %957 = vmatmul.mubr.bf16.gmra.mrb[0].mxu0 %v468
  %v958 = vpop.f32.mrb[0].mxu0
  %v959 = vadd.f32 %v170, %v958
  %v960 = vpop.f32.mrb[0].mxu0
  %v961 = vpop.f32.mrb[0].mxu0
  %v962 = vadd.f32 %v170, %v961
  %v963 = vpop.f32.mrb[0].mxu0
  %964 = vmatprep.mubr.bf16.mxu0 0
  %965 = vmatmul.mubr.bf16.gmra.mrb[0].mxu0 %v469
  %v966 = vpop.f32.mrb[0].mxu0
  %v967 = vadd.f32 %v170, %v966
  %v968 = vpop.f32.mrb[0].mxu0
  %v969 = vpop.f32.mrb[0].mxu0
  %v970 = vadd.f32 %v170, %v969
  %v971 = vpop.f32.mrb[0].mxu0
  %972 = vmatprep.mubr.bf16.mxu0 0
  %973 = vmatmul.mubr.bf16.gmra.mrb[0].mxu0 %v470
  %v974 = vpop.f32.mrb[0].mxu0
  %v975 = vadd.f32 %v170, %v974
  %v976 = vpop.f32.mrb[0].mxu0
  %v977 = vpop.f32.mrb[0].mxu0
  %v978 = vadd.f32 %v170, %v977
  %v979 = vpop.f32.mrb[0].mxu0
  %980 = vmatprep.mubr.bf16.mxu0 0
  %981 = vmatmul.mubr.bf16.gmra.mrb[0].mxu0 %v471
  %v982 = vpop.f32.mrb[0].mxu0
  %v983 = vadd.f32 %v170, %v982
  %v984 = vpop.f32.mrb[0].mxu0
  %v985 = vpop.f32.mrb[0].mxu0
  %v986 = vadd.f32 %v170, %v985
  %v987 = vpop.f32.mrb[0].mxu0
  %988 = vmatprep.mubr.bf16.mxu0 0
  %989 = vmatmul.mubr.bf16.gmra.mrb[0].mxu0 %v472
  %v990 = vpop.f32.mrb[0].mxu0
  %v991 = vadd.f32 %v170, %v990
  %v992 = vpop.f32.mrb[0].mxu0
  %v993 = vpop.f32.mrb[0].mxu0
  %v994 = vadd.f32 %v170, %v993
  %v995 = vpop.f32.mrb[0].mxu0
  %996 = vmatprep.mubr.bf16.mxu0 0
  %997 = vmatmul.mubr.bf16.gmra.mrb[0].mxu0 %v473
  %v998 = vpop.f32.mrb[0].mxu0
  %v999 = vadd.f32 %v170, %v998
  %v1000 = vpop.f32.mrb[0].mxu0
  %v1001 = vpop.f32.mrb[0].mxu0
  %v1002 = vadd.f32 %v170, %v1001
  %v1003 = vpop.f32.mrb[0].mxu0
  %1004 = vmatprep.mubr.bf16.mxu0 0
  %1005 = vmatmul.mubr.bf16.gmra.mrb[0].mxu0 %v474
  %v1006 = vpop.f32.mrb[0].mxu0
  %v1007 = vadd.f32 %v170, %v1006
  %v1008 = vpop.f32.mrb[0].mxu0
  %v1009 = vpop.f32.mrb[0].mxu0
  %v1010 = vadd.f32 %v170, %v1009
  %v1011 = vpop.f32.mrb[0].mxu0
  %1012 = vmatprep.mubr.bf16.mxu0 0
  %1013 = vmatmul.mubr.bf16.gmra.mrb[0].mxu0 %v475
  %v1014 = vpop.f32.mrb[0].mxu0
  %v1015 = vadd.f32 %v170, %v1014
  %v1016 = vpop.f32.mrb[0].mxu0
  %v1017 = vpop.f32.mrb[0].mxu0
  %v1018 = vadd.f32 %v170, %v1017
  %v1019 = vpop.f32.mrb[0].mxu0
  %1020 = vmatprep.mubr.bf16.mxu0 0
  %1021 = vmatmul.mubr.bf16.gmra.mrb[0].mxu0 %v476
  %v1022 = vpop.f32.mrb[0].mxu0
  %v1023 = vadd.f32 %v170, %v1022
  %v1024 = vpop.f32.mrb[0].mxu0
  %v1025 = vpop.f32.mrb[0].mxu0
  %v1026 = vadd.f32 %v170, %v1025
  %v1027 = vpop.f32.mrb[0].mxu0
  %1028 = vmatprep.mubr.bf16.mxu0 0
  %1029 = vmatmul.mubr.bf16.gmra.mrb[0].mxu0 %v477
  %v1030 = vpop.f32.mrb[0].mxu0
  %v1031 = vadd.f32 %v170, %v1030
  %v1032 = vpop.f32.mrb[0].mxu0
  %v1033 = vpop.f32.mrb[0].mxu0
  %v1034 = vadd.f32 %v170, %v1033
  %v1035 = vpop.f32.mrb[0].mxu0
  %1036 = vmatprep.mubr.bf16.mxu0 0
  %1037 = vmatmul.mubr.bf16.gmra.mrb[0].mxu0 %v478
  %v1038 = vpop.f32.mrb[0].mxu0
  %v1039 = vadd.f32 %v170, %v1038
  %v1040 = vpop.f32.mrb[0].mxu0
  %v1041 = vpop.f32.mrb[0].mxu0
  %v1042 = vadd.f32 %v170, %v1041
  %v1043 = vpop.f32.mrb[0].mxu0
  %1044 = vmatprep.mubr.bf16.mxu0 0
  %1045 = vmatmul.mubr.bf16.gmra.mrb[0].mxu0 %v479
  %v1046 = vpop.f32.mrb[0].mxu0
  %v1047 = vadd.f32 %v170, %v1046
  %v1048 = vpop.f32.mrb[0].mxu0
  %v1049 = vpop.f32.mrb[0].mxu0
  %v1050 = vadd.f32 %v170, %v1049
  %v1051 = vpop.f32.mrb[0].mxu0
  %1052 = vmatprep.mubr.bf16.mxu0 0
  %1053 = vmatmul.mubr.bf16.gmra.mrb[0].mxu0 %v480
  %v1054 = vpop.f32.mrb[0].mxu0
  %v1055 = vadd.f32 %v170, %v1054
  %v1056 = vpop.f32.mrb[0].mxu0
  %v1057 = vpop.f32.mrb[0].mxu0
  %v1058 = vadd.f32 %v170, %v1057
  %v1059 = vpop.f32.mrb[0].mxu0
  %1060 = vmatprep.mubr.bf16.mxu0 0
  %1061 = vmatmul.mubr.bf16.gmra.mrb[0].mxu0 %v481
  %v1062 = vpop.f32.mrb[0].mxu0
  %v1063 = vadd.f32 %v170, %v1062
  %v1064 = vpop.f32.mrb[0].mxu0
  %v1065 = vpop.f32.mrb[0].mxu0
  %v1066 = vadd.f32 %v170, %v1065
  %v1067 = vpop.f32.mrb[0].mxu0
  %1068 = vmatprep.mubr.bf16.mxu0 0
  %1069 = vmatmul.mubr.bf16.gmra.mrb[0].mxu0 %v482
  %v1070 = vpop.f32.mrb[0].mxu0
  %v1071 = vadd.f32 %v170, %v1070
  %v1072 = vpop.f32.mrb[0].mxu0
  %v1073 = vpop.f32.mrb[0].mxu0
  %v1074 = vadd.f32 %v170, %v1073
  %v1075 = vpop.f32.mrb[0].mxu0
  %1076 = vmatprep.mubr.bf16.mxu0 0
  %1077 = vmatmul.mubr.bf16.gmra.mrb[0].mxu0 %v483
  %v1078 = vpop.f32.mrb[0].mxu0
  %v1079 = vadd.f32 %v170, %v1078
  %v1080 = vpop.f32.mrb[0].mxu0
  %v1081 = vpop.f32.mrb[0].mxu0
  %v1082 = vadd.f32 %v170, %v1081
  %v1083 = vpop.f32.mrb[0].mxu0
  %1084 = vmatprep.mubr.bf16.mxu0 0
  %1085 = vmatmul.mubr.bf16.gmra.mrb[0].mxu0 %v484
  %v1086 = vpop.f32.mrb[0].mxu0
  %v1087 = vadd.f32 %v170, %v1086
  %v1088 = vpop.f32.mrb[0].mxu0
  %v1089 = vpop.f32.mrb[0].mxu0
  %v1090 = vadd.f32 %v170, %v1089
  %v1091 = vpop.f32.mrb[0].mxu0
  %1092 = vmatprep.mubr.bf16.mxu0 0
  %1093 = vmatmul.mubr.bf16.gmra.mrb[0].mxu0 %v485
  %v1094 = vpop.f32.mrb[0].mxu0
  %v1095 = vadd.f32 %v170, %v1094
  %v1096 = vpop.f32.mrb[0].mxu0
  %v1097 = vpop.f32.mrb[0].mxu0
  %v1098 = vadd.f32 %v170, %v1097
  %v1099 = vpop.f32.mrb[0].mxu0
  %1100 = vmatprep.mubr.bf16.mxu0 0
  %1101 = vmatmul.mubr.bf16.gmra.mrb[0].mxu0 %v486
  %v1102 = vpop.f32.mrb[0].mxu0
  %v1103 = vadd.f32 %v170, %v1102
  %v1104 = vpop.f32.mrb[0].mxu0
  %v1105 = vpop.f32.mrb[0].mxu0
  %v1106 = vadd.f32 %v170, %v1105
  %v1107 = vpop.f32.mrb[0].mxu0
  %1108 = vmatprep.mubr.bf16.mxu0 0
  %1109 = vmatmul.mubr.bf16.gmra.mrb[0].mxu0 %v487
  %v1110 = vpop.f32.mrb[0].mxu0
  %v1111 = vadd.f32 %v170, %v1110
  %v1112 = vpop.f32.mrb[0].mxu0
  %v1113 = vpop.f32.mrb[0].mxu0
  %v1114 = vadd.f32 %v170, %v1113
  %v1115 = vpop.f32.mrb[0].mxu0
  %1116 = vmatprep.mubr.bf16.mxu0 0
  %1117 = vmatmul.mubr.bf16.gmra.mrb[0].mxu0 %v488
  %v1118 = vpop.f32.mrb[0].mxu0
  %v1119 = vadd.f32 %v170, %v1118
  %v1120 = vpop.f32.mrb[0].mxu0
  %v1121 = vpop.f32.mrb[0].mxu0
  %v1122 = vadd.f32 %v170, %v1121
  %v1123 = vpop.f32.mrb[0].mxu0
  %1124 = vmatprep.mubr.bf16.mxu0 0
  %1125 = vmatmul.mubr.bf16.gmra.mrb[0].mxu0 %v489
  %v1126 = vpop.f32.mrb[0].mxu0
  %v1127 = vadd.f32 %v170, %v1126
  %v1128 = vpop.f32.mrb[0].mxu0
  %v1129 = vpop.f32.mrb[0].mxu0
  %v1130 = vadd.f32 %v170, %v1129
  %v1131 = vpop.f32.mrb[0].mxu0
  %1132 = vmatprep.mubr.bf16.mxu0 0
  %1133 = vmatmul.mubr.bf16.gmra.mrb[0].mxu0 %v490
  %v1134 = vpop.f32.mrb[0].mxu0
  %v1135 = vadd.f32 %v170, %v1134
  %v1136 = vpop.f32.mrb[0].mxu0
  %v1137 = vpop.f32.mrb[0].mxu0
  %v1138 = vadd.f32 %v170, %v1137
  %v1139 = vpop.f32.mrb[0].mxu0
  %1140 = vmatprep.mubr.bf16.mxu0 0
  %1141 = vmatmul.mubr.bf16.gmra.mrb[0].mxu0 %v491
  %v1142 = vpop.f32.mrb[0].mxu0
  %v1143 = vadd.f32 %v170, %v1142
  %v1144 = vpop.f32.mrb[0].mxu0
  %v1145 = vpop.f32.mrb[0].mxu0
  %v1146 = vadd.f32 %v170, %v1145
  %v1147 = vpop.f32.mrb[0].mxu0
  %1148 = vdwg.mxu0
  %v1149 = vmax.f32 %v639, 0.0
  %v1150 = vmax.f32 %v642, 0.0
  %v1151 = vmax.f32 %v647, 0.0
  %v1152 = vmax.f32 %v650, 0.0
  %v1153 = vmax.f32 %v655, 0.0
  %v1154 = vmax.f32 %v658, 0.0
  %v1155 = vmax.f32 %v663, 0.0
  %v1156 = vmax.f32 %v666, 0.0
  %v1157 = vmax.f32 %v671, 0.0
  %v1158 = vmax.f32 %v674, 0.0
  %v1159 = vmax.f32 %v679, 0.0
  %v1160 = vmax.f32 %v682, 0.0
  %v1161 = vmax.f32 %v687, 0.0
  %v1162 = vmax.f32 %v690, 0.0
  %v1163 = vmax.f32 %v695, 0.0
  %v1164 = vmax.f32 %v698, 0.0
  %v1165 = vmax.f32 %v703, 0.0
  %v1166 = vmax.f32 %v706, 0.0
  %v1167 = vmax.f32 %v711, 0.0
  %v1168 = vmax.f32 %v714, 0.0
  %v1169 = vmax.f32 %v719, 0.0
  %v1170 = vmax.f32 %v722, 0.0
  %v1171 = vmax.f32 %v727, 0.0
  %v1172 = vmax.f32 %v730, 0.0
  %v1173 = vmax.f32 %v735, 0.0
  %v1174 = vmax.f32 %v738, 0.0
  %v1175 = vmax.f32 %v743, 0.0
  %v1176 = vmax.f32 %v746, 0.0
  %v1177 = vmax.f32 %v751, 0.0
  %v1178 = vmax.f32 %v754, 0.0
  %v1179 = vmax.f32 %v759, 0.0
  %v1180 = vmax.f32 %v762, 0.0
  %v1181 = vmax.f32 %v767, 0.0
  %v1182 = vmax.f32 %v770, 0.0
  %v1183 = vmax.f32 %v775, 0.0
  %v1184 = vmax.f32 %v778, 0.0
  %v1185 = vmax.f32 %v783, 0.0
  %v1186 = vmax.f32 %v786, 0.0
  %v1187 = vmax.f32 %v791, 0.0
  %v1188 = vmax.f32 %v794, 0.0
  %v1189 = vmax.f32 %v799, 0.0
  %v1190 = vmax.f32 %v802, 0.0
  %v1191 = vmax.f32 %v807, 0.0
  %v1192 = vmax.f32 %v810, 0.0
  %v1193 = vmax.f32 %v815, 0.0
  %v1194 = vmax.f32 %v818, 0.0
  %v1195 = vmax.f32 %v823, 0.0
  %v1196 = vmax.f32 %v826, 0.0
  %v1197 = vmax.f32 %v831, 0.0
  %v1198 = vmax.f32 %v834, 0.0
  %v1199 = vmax.f32 %v839, 0.0
  %v1200 = vmax.f32 %v842, 0.0
  %v1201 = vmax.f32 %v847, 0.0
  %v1202 = vmax.f32 %v850, 0.0
  %v1203 = vmax.f32 %v855, 0.0
  %v1204 = vmax.f32 %v858, 0.0
  %v1205 = vmax.f32 %v863, 0.0
  %v1206 = vmax.f32 %v866, 0.0
  %v1207 = vmax.f32 %v871, 0.0
  %v1208 = vmax.f32 %v874, 0.0
  %v1209 = vmax.f32 %v879, 0.0
  %v1210 = vmax.f32 %v882, 0.0
  %v1211 = vmax.f32 %v887, 0.0
  %v1212 = vmax.f32 %v890, 0.0
  %v1213 = vmax.f32 %v895, 0.0
  %v1214 = vmax.f32 %v898, 0.0
  %v1215 = vmax.f32 %v903, 0.0
  %v1216 = vmax.f32 %v906, 0.0
  %v1217 = vmax.f32 %v911, 0.0
  %v1218 = vmax.f32 %v914, 0.0
  %v1219 = vmax.f32 %v919, 0.0
  %v1220 = vmax.f32 %v922, 0.0
  %v1221 = vmax.f32 %v927, 0.0
  %v1222 = vmax.f32 %v930, 0.0
  %v1223 = vmax.f32 %v935, 0.0
  %v1224 = vmax.f32 %v938, 0.0
  %v1225 = vmax.f32 %v943, 0.0
  %v1226 = vmax.f32 %v946, 0.0
  %v1227 = vmax.f32 %v951, 0.0
  %v1228 = vmax.f32 %v954, 0.0
  %v1229 = vmax.f32 %v959, 0.0
  %v1230 = vmax.f32 %v962, 0.0
  %v1231 = vmax.f32 %v967, 0.0
  %v1232 = vmax.f32 %v970, 0.0
  %v1233 = vmax.f32 %v975, 0.0
  %v1234 = vmax.f32 %v978, 0.0
  %v1235 = vmax.f32 %v983, 0.0
  %v1236 = vmax.f32 %v986, 0.0
  %v1237 = vmax.f32 %v991, 0.0
  %v1238 = vmax.f32 %v994, 0.0
  %v1239 = vmax.f32 %v999, 0.0
  %v1240 = vmax.f32 %v1002, 0.0
  %v1241 = vmax.f32 %v1007, 0.0
  %v1242 = vmax.f32 %v1010, 0.0
  %v1243 = vmax.f32 %v1015, 0.0
  %v1244 = vmax.f32 %v1018, 0.0
  %v1245 = vmax.f32 %v1023, 0.0
  %v1246 = vmax.f32 %v1026, 0.0
  %v1247 = vmax.f32 %v1031, 0.0
  %v1248 = vmax.f32 %v1034, 0.0
  %v1249 = vmax.f32 %v1039, 0.0
  %v1250 = vmax.f32 %v1042, 0.0
  %v1251 = vmax.f32 %v1047, 0.0
  %v1252 = vmax.f32 %v1050, 0.0
  %v1253 = vmax.f32 %v1055, 0.0
  %v1254 = vmax.f32 %v1058, 0.0
  %v1255 = vmax.f32 %v1063, 0.0
  %v1256 = vmax.f32 %v1066, 0.0
  %v1257 = vmax.f32 %v1071, 0.0
  %v1258 = vmax.f32 %v1074, 0.0
  %v1259 = vmax.f32 %v1079, 0.0
  %v1260 = vmax.f32 %v1082, 0.0
  %v1261 = vmax.f32 %v1087, 0.0
  %v1262 = vmax.f32 %v1090, 0.0
  %v1263 = vmax.f32 %v1095, 0.0
  %v1264 = vmax.f32 %v1098, 0.0
  %v1265 = vmax.f32 %v1103, 0.0
  %v1266 = vmax.f32 %v1106, 0.0
  %v1267 = vmax.f32 %v1111, 0.0
  %v1268 = vmax.f32 %v1114, 0.0
  %v1269 = vmax.f32 %v1119, 0.0
  %v1270 = vmax.f32 %v1122, 0.0
  %v1271 = vmax.f32 %v1127, 0.0
  %v1272 = vmax.f32 %v1130, 0.0
  %v1273 = vmax.f32 %v1135, 0.0
  %v1274 = vmax.f32 %v1138, 0.0
  %v1275 = vmax.f32 %v1143, 0.0
  %v1276 = vmax.f32 %v1146, 0.0
  %v1277 = vadd.f32 %v1149, %v1150
  %v1278 = vadd.f32 %v1277, %v1151
  %v1279 = vadd.f32 %v1278, %v1152
  %v1280 = vadd.f32 %v1279, %v1153
  %v1281 = vadd.f32 %v1280, %v1154
  %v1282 = vadd.f32 %v1281, %v1155
  %v1283 = vadd.f32 %v1282, %v1156
  %v1284 = vadd.f32 %v1283, %v1157
  %v1285 = vadd.f32 %v1284, %v1158
  %v1286 = vadd.f32 %v1285, %v1159
  %v1287 = vadd.f32 %v1286, %v1160
  %v1288 = vadd.f32 %v1287, %v1161
  %v1289 = vadd.f32 %v1288, %v1162
  %v1290 = vadd.f32 %v1289, %v1163
  %v1291 = vadd.f32 %v1290, %v1164
  %v1292 = vadd.f32 %v1291, %v1165
  %v1293 = vadd.f32 %v1292, %v1166
  %v1294 = vadd.f32 %v1293, %v1167
  %v1295 = vadd.f32 %v1294, %v1168
  %v1296 = vadd.f32 %v1295, %v1169
  %v1297 = vadd.f32 %v1296, %v1170
  %v1298 = vadd.f32 %v1297, %v1171
  %v1299 = vadd.f32 %v1298, %v1172
  %v1300 = vadd.f32 %v1299, %v1173
  %v1301 = vadd.f32 %v1300, %v1174
  %v1302 = vadd.f32 %v1301, %v1175
  %v1303 = vadd.f32 %v1302, %v1176
  %v1304 = vadd.f32 %v1303, %v1177
  %v1305 = vadd.f32 %v1304, %v1178
  %v1306 = vadd.f32 %v1305, %v1179
  %v1307 = vadd.f32 %v1306, %v1180
  %v1308 = vrot.slane %v1307, 4
  %v1309 = vadd.f32 %v1307, %v1308
  %v1310 = vrot.slane %v1309, 2
  %v1311 = vadd.f32 %v1309, %v1310
  %v1312 = vrot.slane %v1311, 1
  %v1313 = vadd.f32 %v1311, %v1312
  %v1314 = vadd.f32 %v1181, %v1182
  %v1315 = vadd.f32 %v1314, %v1183
  %v1316 = vadd.f32 %v1315, %v1184
  %v1317 = vadd.f32 %v1316, %v1185
  %v1318 = vadd.f32 %v1317, %v1186
  %v1319 = vadd.f32 %v1318, %v1187
  %v1320 = vadd.f32 %v1319, %v1188
  %v1321 = vadd.f32 %v1320, %v1189
  %v1322 = vadd.f32 %v1321, %v1190
  %v1323 = vadd.f32 %v1322, %v1191
  %v1324 = vadd.f32 %v1323, %v1192
  %v1325 = vadd.f32 %v1324, %v1193
  %v1326 = vadd.f32 %v1325, %v1194
  %v1327 = vadd.f32 %v1326, %v1195
  %v1328 = vadd.f32 %v1327, %v1196
  %v1329 = vadd.f32 %v1328, %v1197
  %v1330 = vadd.f32 %v1329, %v1198
  %v1331 = vadd.f32 %v1330, %v1199
  %v1332 = vadd.f32 %v1331, %v1200
  %v1333 = vadd.f32 %v1332, %v1201
  %v1334 = vadd.f32 %v1333, %v1202
  %v1335 = vadd.f32 %v1334, %v1203
  %v1336 = vadd.f32 %v1335, %v1204
  %v1337 = vadd.f32 %v1336, %v1205
  %v1338 = vadd.f32 %v1337, %v1206
  %v1339 = vadd.f32 %v1338, %v1207
  %v1340 = vadd.f32 %v1339, %v1208
  %v1341 = vadd.f32 %v1340, %v1209
  %v1342 = vadd.f32 %v1341, %v1210
  %v1343 = vadd.f32 %v1342, %v1211
  %v1344 = vadd.f32 %v1343, %v1212
  %v1345 = vrot.slane %v1344, 4
  %v1346 = vadd.f32 %v1344, %v1345
  %v1347 = vrot.slane %v1346, 2
  %v1348 = vadd.f32 %v1346, %v1347
  %v1349 = vrot.slane %v1348, 1
  %v1350 = vadd.f32 %v1348, %v1349
  %v1351 = vadd.f32 %v1213, %v1214
  %v1352 = vadd.f32 %v1351, %v1215
  %v1353 = vadd.f32 %v1352, %v1216
  %v1354 = vadd.f32 %v1353, %v1217
  %v1355 = vadd.f32 %v1354, %v1218
  %v1356 = vadd.f32 %v1355, %v1219
  %v1357 = vadd.f32 %v1356, %v1220
  %v1358 = vadd.f32 %v1357, %v1221
  %v1359 = vadd.f32 %v1358, %v1222
  %v1360 = vadd.f32 %v1359, %v1223
  %v1361 = vadd.f32 %v1360, %v1224
  %v1362 = vadd.f32 %v1361, %v1225
  %v1363 = vadd.f32 %v1362, %v1226
  %v1364 = vadd.f32 %v1363, %v1227
  %v1365 = vadd.f32 %v1364, %v1228
  %v1366 = vadd.f32 %v1365, %v1229
  %v1367 = vadd.f32 %v1366, %v1230
  %v1368 = vadd.f32 %v1367, %v1231
  %v1369 = vadd.f32 %v1368, %v1232
  %v1370 = vadd.f32 %v1369, %v1233
  %v1371 = vadd.f32 %v1370, %v1234
  %v1372 = vadd.f32 %v1371, %v1235
  %v1373 = vadd.f32 %v1372, %v1236
  %v1374 = vadd.f32 %v1373, %v1237
  %v1375 = vadd.f32 %v1374, %v1238
  %v1376 = vadd.f32 %v1375, %v1239
  %v1377 = vadd.f32 %v1376, %v1240
  %v1378 = vadd.f32 %v1377, %v1241
  %v1379 = vadd.f32 %v1378, %v1242
  %v1380 = vadd.f32 %v1379, %v1243
  %v1381 = vadd.f32 %v1380, %v1244
  %v1382 = vrot.slane %v1381, 4
  %v1383 = vadd.f32 %v1381, %v1382
  %v1384 = vrot.slane %v1383, 2
  %v1385 = vadd.f32 %v1383, %v1384
  %v1386 = vrot.slane %v1385, 1
  %v1387 = vadd.f32 %v1385, %v1386
  %v1388 = vadd.f32 %v1245, %v1246
  %v1389 = vadd.f32 %v1388, %v1247
  %v1390 = vadd.f32 %v1389, %v1248
  %v1391 = vadd.f32 %v1390, %v1249
  %v1392 = vadd.f32 %v1391, %v1250
  %v1393 = vadd.f32 %v1392, %v1251
  %v1394 = vadd.f32 %v1393, %v1252
  %v1395 = vadd.f32 %v1394, %v1253
  %v1396 = vadd.f32 %v1395, %v1254
  %v1397 = vadd.f32 %v1396, %v1255
  %v1398 = vadd.f32 %v1397, %v1256
  %v1399 = vadd.f32 %v1398, %v1257
  %v1400 = vadd.f32 %v1399, %v1258
  %v1401 = vadd.f32 %v1400, %v1259
  %v1402 = vadd.f32 %v1401, %v1260
  %v1403 = vadd.f32 %v1402, %v1261
  %v1404 = vadd.f32 %v1403, %v1262
  %v1405 = vadd.f32 %v1404, %v1263
  %v1406 = vadd.f32 %v1405, %v1264
  %v1407 = vadd.f32 %v1406, %v1265
  %v1408 = vadd.f32 %v1407, %v1266
  %v1409 = vadd.f32 %v1408, %v1267
  %v1410 = vadd.f32 %v1409, %v1268
  %v1411 = vadd.f32 %v1410, %v1269
  %v1412 = vadd.f32 %v1411, %v1270
  %v1413 = vadd.f32 %v1412, %v1271
  %v1414 = vadd.f32 %v1413, %v1272
  %v1415 = vadd.f32 %v1414, %v1273
  %v1416 = vadd.f32 %v1415, %v1274
  %v1417 = vadd.f32 %v1416, %v1275
  %v1418 = vadd.f32 %v1417, %v1276
  %v1419 = vrot.slane %v1418, 4
  %v1420 = vadd.f32 %v1418, %v1419
  %v1421 = vrot.slane %v1420, 2
  %v1422 = vadd.f32 %v1420, %v1421
  %v1423 = vrot.slane %v1422, 1
  %v1424 = vadd.f32 %v1422, %v1423
  %v1425 = vpack.c.bf16 %v1313, %v1313
  %v1426 = vpack.c.bf16 %v1350, %v1350
  %v1427 = vpack.c.bf16 %v1387, %v1387
  %v1428 = vpack.c.bf16 %v1424, %v1424
  %v1429 = vld [vmem:[%s3] sm:$0xf]
  %v1430 = vld [vmem:[%s3 + $0x4] sm:$0xf]
  %v1431 = vld [vmem:[%s3 + $0x8] sm:$0xf]
  %v1432 = vld [vmem:[%s3 + $0xc] sm:$0xf]
  %v1433 = vld [vmem:[%s3 + $0x10] sm:$0xf]
  %v1434 = vld [vmem:[%s3 + $0x14] sm:$0xf]
  %v1435 = vld [vmem:[%s3 + $0x18] sm:$0xf]
  %v1436 = vld [vmem:[%s3 + $0x1c] sm:$0xf]
  %v1437 = vld [vmem:[%s3 + $0x20] sm:$0xf]
  %v1438 = vld [vmem:[%s3 + $0x24] sm:$0xf]
  %v1439 = vld [vmem:[%s3 + $0x28] sm:$0xf]
  %v1440 = vld [vmem:[%s3 + $0x2c] sm:$0xf]
  %v1441 = vld [vmem:[%s3 + $0x30] sm:$0xf]
  %v1442 = vld [vmem:[%s3 + $0x34] sm:$0xf]
  %v1443 = vld [vmem:[%s3 + $0x38] sm:$0xf]
  %v1444 = vld [vmem:[%s3 + $0x3c] sm:$0xf]
  %v1445 = vld [vmem:[%s4] sm:$0x1]
  %v1447 = vlaneseq
  %v1448 = vshrl.u32 %v1447, 7
  %v1449 = vsub.s32 0, %v1448
  %v1450 = vrot.slane %v1445, %v1449
  %v1456 = vunpack.c.l.b16 %v1425
  %v1457 = vunpack.c.l.b16 %v1426
  %v1458 = vunpack.c.l.b16 %v1427
  %v1459 = vunpack.c.l.b16 %v1428
  %vm1460 = vcmask 1041409
  %v1461 = vsel %vm1460, %v1457, %v1456
  %vm1462 = vcmask 1042434
  %v1463 = vsel %vm1462, %v1458, %v1461
  %vm1464 = vcmask 1043459
  %v1465 = vsel %vm1464, %v1459, %v1463
  %v1466 = vpack.c.b16 %v1465, %v1465
  %v1484 = vunpack.c.l.b16 %v1429
  %v1485 = vunpack.c.l.b16 %v1430
  %v1486 = vunpack.c.l.b16 %v1431
  %v1487 = vunpack.c.l.b16 %v1432
  %v1488 = vunpack.c.l.b16 %v1433
  %v1489 = vunpack.c.l.b16 %v1434
  %v1490 = vunpack.c.l.b16 %v1435
  %v1491 = vunpack.c.l.b16 %v1436
  %v1492 = vunpack.c.l.b16 %v1437
  %v1493 = vunpack.c.l.b16 %v1438
  %v1494 = vunpack.c.l.b16 %v1439
  %v1495 = vunpack.c.l.b16 %v1440
  %v1496 = vunpack.c.l.b16 %v1441
  %v1497 = vunpack.c.l.b16 %v1442
  %v1498 = vunpack.c.l.b16 %v1443
  %v1499 = vunpack.c.l.b16 %v1444
  %v1500 = vpack.c.b16 %v1485, %v1484
  %v1501 = vpack.c.b16 %v1487, %v1486
  %v1502 = vpack.c.b16 %v1489, %v1488
  %v1503 = vpack.c.b16 %v1491, %v1490
  %v1504 = vpack.c.b16 %v1493, %v1492
  %v1505 = vpack.c.b16 %v1495, %v1494
  %v1506 = vpack.c.b16 %v1497, %v1496
  %v1507 = vpack.c.b16 %v1499, %v1498
  %1516 = vmatprep.subr.bf16.mxu0 0
  %1517 = vmatpush1.bf16.msra.mxu0 %v1500
  %1518 = vmatprep.subr.bf16.mxu0 0
  %1519 = vmatpush1.bf16.msra.mxu0 %v1501
  %1520 = vmatprep.subr.bf16.mxu0 0
  %1521 = vmatpush1.bf16.msra.mxu0 %v1502
  %1522 = vmatprep.subr.bf16.mxu0 0
  %1523 = vmatpush1.bf16.msra.mxu0 %v1503
  %1524 = vmatprep.subr.bf16.mxu0 0
  %1525 = vmatpush1.bf16.msra.mxu0 %v1504
  %1526 = vmatprep.subr.bf16.mxu0 0
  %1527 = vmatpush1.bf16.msra.mxu0 %v1505
  %1528 = vmatprep.subr.bf16.mxu0 0
  %1529 = vmatpush1.bf16.msra.mxu0 %v1506
  %1530 = vmatprep.subr.bf16.mxu0 0
  %1531 = vmatpush1.bf16.msra.mxu0 %v1507
  %1532 = vmatprep.subr.bf16.mxu0 0
  %1533 = vmatpush1.bf16.msra.mxu0 0
  %1534 = vmatprep.subr.bf16.mxu0 0
  %1535 = vmatpush1.bf16.msra.mxu0 0
  %1536 = vmatprep.subr.bf16.mxu0 0
  %1537 = vmatpush1.bf16.msra.mxu0 0
  %1538 = vmatprep.subr.bf16.mxu0 0
  %1539 = vmatpush1.bf16.msra.mxu0 0
  %1540 = vmatprep.subr.bf16.mxu0 0
  %1541 = vmatpush1.bf16.msra.mxu0 0
  %1542 = vmatprep.subr.bf16.mxu0 0
  %1543 = vmatpush1.bf16.msra.mxu0 0
  %1544 = vmatprep.subr.bf16.mxu0 0
  %1545 = vmatpush1.bf16.msra.mxu0 0
  %1546 = vmatprep.subr.bf16.mxu0 0
  %1547 = vmatpush1.bf16.msra.mxu0 0
  %1548 = vmatprep.mubr.bf16.mxu0 0
  %1549 = vmatmul.mubr.bf16.gmra.mrb[0].mxu0 %v1466
  %v1550 = vpop.f32.mrb[0].mxu0
  %v1551 = vadd.f32 %v1450, %v1550
  %v1552 = vpop.f32.mrb[0].mxu0
  %v1553 = vpop.f32.mrb[0].mxu0
  %v1554 = vpop.f32.mrb[0].mxu0
  %1555 = vdwg.mxu0
  %1556 = vst [vmem:[%s5] sm:$0xf] %v1551
  // Predicated region
  $region22: #{kinship_forward.1} parent=0 // pred_check
    _
  $region23: #{kinship_forward.1} parent=0 // pred_check_branch
    %1558 = sbr.rel (0) target = $region25
  $region24: #{kinship_forward.1} parent=0 // pred_region
    _
  $region25: #{kinship_forward.1} parent=0 // pred_fallthru
    _
  // Predicated region
  $region26: #{kinship_forward.1} parent=0 // pred_check
    _
  $region27: #{kinship_forward.1} parent=0 // pred_check_branch
    %1560 = sbr.rel (0) target = $region29
  $region28: #{kinship_forward.1} parent=0 // pred_region
    _
  $region29: #{kinship_forward.1} parent=0 // pred_fallthru
    _

</llo_original>
